<compile_context>
chip_gen: v6e
topology: v6e:2x2x1
jax: 0.10.0
libtpu: 0.0.40
codegen_flags: <defaults>
</compile_context>

<pallas_src>
import jax
import jax.numpy as jnp
from jax.experimental import pallas as pl
from jax.experimental.pallas import tpu as pltpu


def _round_up(v, m):
    return ((v + m - 1) // m) * m


def _make_mlp_kernel(num_sub, sub_rows, compute_dtype):
    def kernel(x_ref,
               w1_ref, b1_ref, w2_ref, b2_ref, w3_ref, b3_ref,
               w4_ref, b4_ref, w5_ref, b5_ref,
               o_ref):

        def layer(h, w_ref, b_ref):
            # MXU matmul with explicit f32 accumulation; bias broadcast on the VPU.
            return jnp.dot(h.astype(compute_dtype), w_ref[...],
                           preferred_element_type=jnp.float32) + b_ref[...]

        def body(t, carry):
            r0 = pl.multiple_of(t * sub_rows, sub_rows)
            h = x_ref[pl.ds(r0, sub_rows), :]
            h = layer(h, w1_ref, b1_ref)
            h = layer(h, w2_ref, b2_ref)
            h = layer(h, w3_ref, b3_ref)
            h = layer(h, w4_ref, b4_ref)
            h = layer(h, w5_ref, b5_ref)
            o_ref[pl.ds(r0, sub_rows), :] = h.astype(o_ref.dtype)
            return carry

        if num_sub == 1:
            body(0, 0)
        else:
            jax.lax.fori_loop(0, num_sub, body, 0, unroll=True)

    return kernel


def hypernetwork_forward(x, params, *, weights_dtype=None, batch_tile=None):
    """x: [B, 32] float32. params: list of (w, b) per layer, w as [in, out], b as [1, out].

    weights_dtype: optionally cast weights (and in-kernel activations) to e.g.
    jnp.bfloat16 for ~3x MXU throughput and half the HBM weight bytes; accumulation
    stays f32.
    """
    (w1, b1), (w2, b2), (w3, b3), (w4, b4), (w5, b5) = params
    B, D_in = x.shape
    D_out = w5.shape[1]

    # ---- lane-dense output: pad final-layer columns up to a multiple of 128.
    D_out_p = _round_up(D_out, 128)
    if D_out_p != D_out:
        w5 = jnp.pad(w5, ((0, 0), (0, D_out_p - D_out)))
        b5 = jnp.pad(b5, ((0, 0), (0, D_out_p - D_out)))

    # ---- weight / bias dtypes (biases stay f32 for the broadcast add).
    weights = [w1, w2, w3, w4, w5]
    if weights_dtype is not None:
        weights = [w.astype(weights_dtype) for w in weights]
    compute_dtype = weights[0].dtype
    biases = [b.astype(jnp.float32) for b in (b1, b2, b3, b4, b5)]
    w1, w2, w3, w4, w5 = weights
    b1, b2, b3, b4, b5 = biases

    # ---- batch tiling: up to 256 rows per grid step (full MXU M on v6e/v7x);
    #      tiny batches collapse to a single grid step, large batches keep a
    #      multi-step "parallel" grid so v7x can shard across its 2 TensorCores.
    if batch_tile is None:
        batch_tile = _round_up(min(max(B, 8), 256), 8)
    batch_tile = _round_up(batch_tile, 8)
    B_p = _round_up(B, batch_tile)
    if B_p != B:
        x = jnp.pad(x, ((0, B_p - B), (0, 0)))

    # Inner compute sub-tiles of <=128 rows keep the (rows, 256) f32 intermediate
    # within the 64-vreg budget even when the DMA block is 256+ rows.
    if batch_tile > 128 and batch_tile % 128 == 0:
        sub_rows = 128
    else:
        sub_rows = batch_tile
    num_sub = batch_tile // sub_rows

    grid = (B_p // batch_tile,)

    def full(shape):
        # Whole-array block, constant index -> fetched once, stays VMEM-resident.
        return pl.BlockSpec(shape, lambda i: (0,) * len(shape))

    out = pl.pallas_call(
        _make_mlp_kernel(num_sub, sub_rows, compute_dtype),
        out_shape=jax.ShapeDtypeStruct((B_p, D_out_p), x.dtype),
        grid_spec=pltpu.PrefetchScalarGridSpec(
            num_scalar_prefetch=0,
            grid=grid,
            in_specs=[
                pl.BlockSpec((batch_tile, D_in), lambda i: (i, 0)),  # x tile
                full(w1.shape), full(b1.shape),
                full(w2.shape), full(b2.shape),
                full(w3.shape), full(b3.shape),
                full(w4.shape), full(b4.shape),
                full(w5.shape), full(b5.shape),
            ],
            out_specs=pl.BlockSpec((batch_tile, D_out_p), lambda i: (i, 0)),
        ),
        compiler_params=pltpu.CompilerParams(
            dimension_semantics=("parallel",),
        ),
    )(x, w1, b1, w2, b2, w3, b3, w4, b4, w5, b5)

    # Strip batch / output-column padding.
    return out[:B, :D_out]


def init_params(key, num_output_param):
    """Deterministic init mimicking nn.Linear shapes (stored transposed: [in, out])."""
    dims = [(32, 256), (256, 256), (256, 256), (256, 256), (256, num_output_param)]
    params = []
    for (fan_in, fan_out) in dims:
        key, kw, kb = jax.random.split(key, 3)
        bound = 1.0 / jnp.sqrt(fan_in)
        w = jax.random.uniform(kw, (fan_in, fan_out), jnp.float32, -bound, bound)
        b = jax.random.uniform(kb, (1, fan_out), jnp.float32, -bound, bound)
        params.append((w, b))
    return params


def reference_forward(x, params):
    h = x
    for (w, b) in params:
        h = h @ w + b
    return h


if __name__ == "__main__":
    key = jax.random.PRNGKey(0)
    kx, kp = jax.random.split(key)

    # --- main small test (matches module spec; single grid step, lane-dense output)
    num_output_param = 128
    batch = 8
    x = jax.random.normal(kx, (batch, 32), jnp.float32)
    params = init_params(kp, num_output_param)

    out = jax.block_until_ready(hypernetwork_forward(x, params))
    ref = reference_forward(x, params)
    assert out.shape == (batch, num_output_param)
    assert jnp.allclose(out, ref, atol=1e-4, rtol=1e-4)

    # --- bf16-weight fast path (f32 accumulation), loose tolerance
    out_bf16 = jax.block_until_ready(
        hypernetwork_forward(x, params, weights_dtype=jnp.bfloat16))
    assert out_bf16.shape == (batch, num_output_param)
    assert jnp.allclose(out_bf16, ref, atol=3e-2, rtol=3e-2)

    # --- exercise batch padding, output-column padding, multi-step grid + sub-tiling
    kx2, kp2 = jax.random.split(jax.random.PRNGKey(1))
    x2 = jax.random.normal(kx2, (300, 32), jnp.float32)
    params2 = init_params(kp2, 100)
    out2 = jax.block_until_ready(hypernetwork_forward(x2, params2))
    ref2 = reference_forward(x2, params2)
    assert out2.shape == (300, 100)
    assert jnp.allclose(out2, ref2, atol=1e-4, rtol=1e-4)

    print("KERNEL_OK")
</pallas_src>

<mosaic_0001>
module attributes {stable_mosaic.version = 11 : i64} {
  func.func @kernel(%arg0: i32, %arg1: memref<8x32xf32, #tpu.memory_space<vmem>>, %arg2: memref<32x256xf32, #tpu.memory_space<vmem>>, %arg3: memref<1x256xf32, #tpu.memory_space<vmem>>, %arg4: memref<256x256xf32, #tpu.memory_space<vmem>>, %arg5: memref<1x256xf32, #tpu.memory_space<vmem>>, %arg6: memref<256x256xf32, #tpu.memory_space<vmem>>, %arg7: memref<1x256xf32, #tpu.memory_space<vmem>>, %arg8: memref<256x256xf32, #tpu.memory_space<vmem>>, %arg9: memref<1x256xf32, #tpu.memory_space<vmem>>, %arg10: memref<256x128xf32, #tpu.memory_space<vmem>>, %arg11: memref<1x128xf32, #tpu.memory_space<vmem>>, %arg12: memref<8x128xf32, #tpu.memory_space<vmem>>) attributes {dimension_semantics = [#tpu.dimension_semantics<parallel>], iteration_bounds = array<i64: 1>, scalar_prefetch = 0 : i64, scratch_operands = 0 : i64, tpu.core_type = #tpu.core_type<tc>, window_params = [{transform_indices = @transform_0, window_bounds = array<i64: 8, 32>}, {pipeline_mode = #tpu.pipeline_mode<synchronous>, transform_indices = @transform_1, window_bounds = array<i64: 32, 256>}, {pipeline_mode = #tpu.pipeline_mode<synchronous>, transform_indices = @transform_2, window_bounds = array<i64: 1, 256>}, {pipeline_mode = #tpu.pipeline_mode<synchronous>, transform_indices = @transform_3, window_bounds = array<i64: 256, 256>}, {pipeline_mode = #tpu.pipeline_mode<synchronous>, transform_indices = @transform_4, window_bounds = array<i64: 1, 256>}, {pipeline_mode = #tpu.pipeline_mode<synchronous>, transform_indices = @transform_5, window_bounds = array<i64: 256, 256>}, {pipeline_mode = #tpu.pipeline_mode<synchronous>, transform_indices = @transform_6, window_bounds = array<i64: 1, 256>}, {pipeline_mode = #tpu.pipeline_mode<synchronous>, transform_indices = @transform_7, window_bounds = array<i64: 256, 256>}, {pipeline_mode = #tpu.pipeline_mode<synchronous>, transform_indices = @transform_8, window_bounds = array<i64: 1, 256>}, {pipeline_mode = #tpu.pipeline_mode<synchronous>, transform_indices = @transform_9, window_bounds = array<i64: 256, 128>}, {pipeline_mode = #tpu.pipeline_mode<synchronous>, transform_indices = @transform_10, window_bounds = array<i64: 1, 128>}, {transform_indices = @transform_11, window_bounds = array<i64: 8, 128>}]} {
    %c0_i32 = arith.constant 0 : i32
    %0 = tpu.assume_multiple %c0_i32, 8 : i32
    %1 = arith.index_cast %0 : i32 to index
    %c0 = arith.constant 0 : index
    %2 = vector.load %arg1[%1, %c0] : memref<8x32xf32, #tpu.memory_space<vmem>>, vector<8x32xf32>
    %c0_0 = arith.constant 0 : index
    %c0_1 = arith.constant 0 : index
    %3 = vector.load %arg2[%c0_0, %c0_1] : memref<32x256xf32, #tpu.memory_space<vmem>>, vector<32x256xf32>
    %cst = arith.constant dense<0.000000e+00> : vector<8x256xf32>
    %4 = tpu.matmul %2, %3, %cst {dimension_numbers = #tpu.dot_dimension_numbers<[1], [0], [0], [1], [0, 0, 1, 1], [], []>} : vector<8x32xf32>, vector<32x256xf32>, vector<8x256xf32> -> vector<8x256xf32>
    %c0_2 = arith.constant 0 : index
    %c0_3 = arith.constant 0 : index
    %5 = vector.load %arg3[%c0_2, %c0_3] : memref<1x256xf32, #tpu.memory_space<vmem>>, vector<1x256xf32>
    %6 = vector.broadcast %5 : vector<1x256xf32> to vector<8x256xf32>
    %7 = arith.addf %4, %6 : vector<8x256xf32>
    %c0_4 = arith.constant 0 : index
    %c0_5 = arith.constant 0 : index
    %8 = vector.load %arg4[%c0_4, %c0_5] : memref<256x256xf32, #tpu.memory_space<vmem>>, vector<256x256xf32>
    %cst_6 = arith.constant dense<0.000000e+00> : vector<8x256xf32>
    %9 = tpu.matmul %7, %8, %cst_6 {dimension_numbers = #tpu.dot_dimension_numbers<[1], [0], [0], [1], [0, 0, 1, 1], [], []>} : vector<8x256xf32>, vector<256x256xf32>, vector<8x256xf32> -> vector<8x256xf32>
    %c0_7 = arith.constant 0 : index
    %c0_8 = arith.constant 0 : index
    %10 = vector.load %arg5[%c0_7, %c0_8] : memref<1x256xf32, #tpu.memory_space<vmem>>, vector<1x256xf32>
    %11 = vector.broadcast %10 : vector<1x256xf32> to vector<8x256xf32>
    %12 = arith.addf %9, %11 : vector<8x256xf32>
    %c0_9 = arith.constant 0 : index
    %c0_10 = arith.constant 0 : index
    %13 = vector.load %arg6[%c0_9, %c0_10] : memref<256x256xf32, #tpu.memory_space<vmem>>, vector<256x256xf32>
    %cst_11 = arith.constant dense<0.000000e+00> : vector<8x256xf32>
    %14 = tpu.matmul %12, %13, %cst_11 {dimension_numbers = #tpu.dot_dimension_numbers<[1], [0], [0], [1], [0, 0, 1, 1], [], []>} : vector<8x256xf32>, vector<256x256xf32>, vector<8x256xf32> -> vector<8x256xf32>
    %c0_12 = arith.constant 0 : index
    %c0_13 = arith.constant 0 : index
    %15 = vector.load %arg7[%c0_12, %c0_13] : memref<1x256xf32, #tpu.memory_space<vmem>>, vector<1x256xf32>
    %16 = vector.broadcast %15 : vector<1x256xf32> to vector<8x256xf32>
    %17 = arith.addf %14, %16 : vector<8x256xf32>
    %c0_14 = arith.constant 0 : index
    %c0_15 = arith.constant 0 : index
    %18 = vector.load %arg8[%c0_14, %c0_15] : memref<256x256xf32, #tpu.memory_space<vmem>>, vector<256x256xf32>
    %cst_16 = arith.constant dense<0.000000e+00> : vector<8x256xf32>
    %19 = tpu.matmul %17, %18, %cst_16 {dimension_numbers = #tpu.dot_dimension_numbers<[1], [0], [0], [1], [0, 0, 1, 1], [], []>} : vector<8x256xf32>, vector<256x256xf32>, vector<8x256xf32> -> vector<8x256xf32>
    %c0_17 = arith.constant 0 : index
    %c0_18 = arith.constant 0 : index
    %20 = vector.load %arg9[%c0_17, %c0_18] : memref<1x256xf32, #tpu.memory_space<vmem>>, vector<1x256xf32>
    %21 = vector.broadcast %20 : vector<1x256xf32> to vector<8x256xf32>
    %22 = arith.addf %19, %21 : vector<8x256xf32>
    %c0_19 = arith.constant 0 : index
    %c0_20 = arith.constant 0 : index
    %23 = vector.load %arg10[%c0_19, %c0_20] : memref<256x128xf32, #tpu.memory_space<vmem>>, vector<256x128xf32>
    %cst_21 = arith.constant dense<0.000000e+00> : vector<8x128xf32>
    %24 = tpu.matmul %22, %23, %cst_21 {dimension_numbers = #tpu.dot_dimension_numbers<[1], [0], [0], [1], [0, 0, 1, 1], [], []>} : vector<8x256xf32>, vector<256x128xf32>, vector<8x128xf32> -> vector<8x128xf32>
    %c0_22 = arith.constant 0 : index
    %c0_23 = arith.constant 0 : index
    %25 = vector.load %arg11[%c0_22, %c0_23] : memref<1x128xf32, #tpu.memory_space<vmem>>, vector<1x128xf32>
    %26 = vector.broadcast %25 : vector<1x128xf32> to vector<8x128xf32>
    %27 = arith.addf %24, %26 : vector<8x128xf32>
    %28 = arith.index_cast %0 : i32 to index
    %c0_24 = arith.constant 0 : index
    %29 = vector.load %arg12[%28, %c0_24] : memref<8x128xf32, #tpu.memory_space<vmem>>, vector<8x128xf32>
    tpu.vector_store %arg12[%28, %c0_24], %27 {strides = array<i32>} : memref<8x128xf32, #tpu.memory_space<vmem>>, vector<8x128xf32>,
    return
  }
  func.func @transform_0(%arg0: i32) -> (i32, i32) {
    %c0_i32 = arith.constant 0 : i32
    %c0_i32_0 = arith.constant 0 : i32
    return %arg0, %c0_i32 : i32, i32
  }
  func.func @transform_1(%arg0: i32) -> (i32, i32) {
    %c0_i32 = arith.constant 0 : i32
    %c0_i32_0 = arith.constant 0 : i32
    %c0_i32_1 = arith.constant 0 : i32
    return %c0_i32, %c0_i32_0 : i32, i32
  }
  func.func @transform_2(%arg0: i32) -> (i32, i32) {
    %c0_i32 = arith.constant 0 : i32
    %c0_i32_0 = arith.constant 0 : i32
    %c0_i32_1 = arith.constant 0 : i32
    return %c0_i32, %c0_i32_0 : i32, i32
  }
  func.func @transform_3(%arg0: i32) -> (i32, i32) {
    %c0_i32 = arith.constant 0 : i32
    %c0_i32_0 = arith.constant 0 : i32
    %c0_i32_1 = arith.constant 0 : i32
    return %c0_i32, %c0_i32_0 : i32, i32
  }
  func.func @transform_4(%arg0: i32) -> (i32, i32) {
    %c0_i32 = arith.constant 0 : i32
    %c0_i32_0 = arith.constant 0 : i32
    %c0_i32_1 = arith.constant 0 : i32
    return %c0_i32, %c0_i32_0 : i32, i32
  }
  func.func @transform_5(%arg0: i32) -> (i32, i32) {
    %c0_i32 = arith.constant 0 : i32
    %c0_i32_0 = arith.constant 0 : i32
    %c0_i32_1 = arith.constant 0 : i32
    return %c0_i32, %c0_i32_0 : i32, i32
  }
  func.func @transform_6(%arg0: i32) -> (i32, i32) {
    %c0_i32 = arith.constant 0 : i32
    %c0_i32_0 = arith.constant 0 : i32
    %c0_i32_1 = arith.constant 0 : i32
    return %c0_i32, %c0_i32_0 : i32, i32
  }
  func.func @transform_7(%arg0: i32) -> (i32, i32) {
    %c0_i32 = arith.constant 0 : i32
    %c0_i32_0 = arith.constant 0 : i32
    %c0_i32_1 = arith.constant 0 : i32
    return %c0_i32, %c0_i32_0 : i32, i32
  }
  func.func @transform_8(%arg0: i32) -> (i32, i32) {
    %c0_i32 = arith.constant 0 : i32
    %c0_i32_0 = arith.constant 0 : i32
    %c0_i32_1 = arith.constant 0 : i32
    return %c0_i32, %c0_i32_0 : i32, i32
  }
  func.func @transform_9(%arg0: i32) -> (i32, i32) {
    %c0_i32 = arith.constant 0 : i32
    %c0_i32_0 = arith.constant 0 : i32
    %c0_i32_1 = arith.constant 0 : i32
    return %c0_i32, %c0_i32_0 : i32, i32
  }
  func.func @transform_10(%arg0: i32) -> (i32, i32) {
    %c0_i32 = arith.constant 0 : i32
    %c0_i32_0 = arith.constant 0 : i32
    %c0_i32_1 = arith.constant 0 : i32
    return %c0_i32, %c0_i32_0 : i32, i32
  }
  func.func @transform_11(%arg0: i32) -> (i32, i32) {
    %c0_i32 = arith.constant 0 : i32
    %c0_i32_0 = arith.constant 0 : i32
    return %arg0, %c0_i32 : i32, i32
  }
}

</mosaic_0001>

<llo_original>
// kernel: tpu_custom_call.1
$region0: #{tpu_custom_call.1}
  #allocation0 [shape = 'u32[]', space=smem, size = 0x4, offset = 0x4, fixed_abs, tag = 'smem constant byte address 0x4 - core index']
  #allocation1 [shape = 'u32[144,128]{1,0:T(1,128)}', space=vmem, size = 0x12000, scoped, tag = 'internal scratch']
  %s0 = inlined_call_operand.hbm [shape: f32[8,32], index: 0, kind: input, shape index: {}]
  %s1 = inlined_call_operand.hbm [shape: f32[32,256], index: 1, kind: input, shape index: {}]
  %s2 = inlined_call_operand.vmem [shape: f32[1,256], index: 2, kind: input, shape index: {}]
  %s3 = inlined_call_operand.hbm [shape: f32[256,256], index: 3, kind: input, shape index: {}]
  %s4 = inlined_call_operand.vmem [shape: f32[1,256], index: 4, kind: input, shape index: {}]
  %s5 = inlined_call_operand.hbm [shape: f32[256,256], index: 5, kind: input, shape index: {}]
  %s6 = inlined_call_operand.vmem [shape: f32[1,256], index: 6, kind: input, shape index: {}]
  %s7 = inlined_call_operand.hbm [shape: f32[256,256], index: 7, kind: input, shape index: {}]
  %s8 = inlined_call_operand.vmem [shape: f32[1,256], index: 8, kind: input, shape index: {}]
  %s9 = inlined_call_operand.hbm [shape: f32[256,128], index: 9, kind: input, shape index: {}]
  %s10 = inlined_call_operand.vmem [shape: f32[1,128], index: 10, kind: input, shape index: {}]
  %s11 = inlined_call_operand.hbm [shape: f32[8,128], index: 11, kind: output, shape index: {}]
  %s12 = sld [smem:[#allocation0]]
  $region78: #{tpu_custom_call.1} parent=0
    _
  %s14 = ssub.s32 1, %s12
  %s15 = scalar_select 0, %s14, %s12
  $region1: #{tpu_custom_call.1} parent=0
    #allocation2 [shape = 'u8[4096]{0}', space=vmem, size = 0x1000, scoped, tag = 'input window, operand 0, single buffered']
    #allocation3 [shape = 's32[1]{0}', space=sflag, size = 0x4, scoped, tag = 'scoped memory for tpu_custom_call.1']
    #allocation4 [shape = 's32[1]{0}', space=sflag, size = 0x4, scoped, tag = 'scoped memory for tpu_custom_call.1']
    #allocation5 [shape = 'u8[32768]{0}', space=vmem, size = 0x8000, scoped, tag = 'input window, operand 1, single buffered']
    #allocation6 [shape = 's32[1]{0}', space=sflag, size = 0x4, scoped, tag = 'scoped memory for tpu_custom_call.1']
    #allocation7 [shape = 'u8[262144]{0}', space=vmem, size = 0x40000, scoped, tag = 'input window, operand 3, single buffered']
    #allocation8 [shape = 'u8[262144]{0}', space=vmem, size = 0x40000, scoped, tag = 'input window, operand 5, single buffered']
    #allocation9 [shape = 's32[1]{0}', space=sflag, size = 0x4, scoped, tag = 'scoped memory for tpu_custom_call.1']
    #allocation10 [shape = 'u8[262144]{0}', space=vmem, size = 0x40000, scoped, tag = 'input window, operand 7, single buffered']
    #allocation11 [shape = 'u8[131072]{0}', space=vmem, size = 0x20000, scoped, tag = 'input window, operand 9, single buffered']
    #allocation12 [shape = 's32[1]{0}', space=sflag, size = 0x4, scoped, tag = 'scoped memory for tpu_custom_call.1']
    #allocation13 [shape = 'u8[4096]{0}', space=vmem, size = 0x1000, scoped, tag = 'output window, operand 0, single buffered']
    %16 = vsyncpa [#allocation3], 0
    %17 = vsyncpa [#allocation6], 0
    %18 = vsyncpa [#allocation9], 0
    %19 = vsyncpa [#allocation12], 0
    %20 = vsyncpa [#allocation4], 0
    // Predicated region
    $region2: #{tpu_custom_call.1} parent=1 // pred_check
      _
    $region3: #{tpu_custom_call.1} parent=1 // pred_check_branch
      %22 = sbr.rel (0) target = $region5
    $region4: #{tpu_custom_call.1} parent=1 // pred_region
      %s24 = ssub.s32 128, 128
      %25 = vsyncadd [#allocation3], %s24
      %s27 = sshll.u32 [#allocation2], 4
      %s28 = int_to_ptr.vmem [resolvable:$true] %s27
      %30 = dma.hbm_to_vmem [thread:$0]  %s0, 128, %s28, [#allocation3]
    $region5: #{tpu_custom_call.1} parent=1 // pred_fallthru
      _
    // Predicated region
    $region6: #{tpu_custom_call.1} parent=1 // pred_check
      _
    $region7: #{tpu_custom_call.1} parent=1 // pred_check_branch
      %32 = sbr.rel (0) target = $region9
    $region8: #{tpu_custom_call.1} parent=1 // pred_region
      %s34 = ssub.s32 1024, 1024
      %35 = vsyncadd [#allocation6], %s34
      %s36 = sshll.u32 [#allocation5], 4
      %s37 = int_to_ptr.vmem [resolvable:$true] %s36
      %42 = dma.hbm_to_vmem [thread:$0]  %s1, 1024, %s37, [#allocation6], 256, 256, 16
    $region9: #{tpu_custom_call.1} parent=1 // pred_fallthru
      _
    // Predicated region
    $region10: #{tpu_custom_call.1} parent=1 // pred_check
      _
    $region11: #{tpu_custom_call.1} parent=1 // pred_check_branch
      %44 = sbr.rel (0) target = $region13
    $region12: #{tpu_custom_call.1} parent=1 // pred_region
      _
    $region13: #{tpu_custom_call.1} parent=1 // pred_fallthru
      _
    // Predicated region
    $region14: #{tpu_custom_call.1} parent=1 // pred_check
      _
    $region15: #{tpu_custom_call.1} parent=1 // pred_check_branch
      %46 = sbr.rel (0) target = $region17
    $region16: #{tpu_custom_call.1} parent=1 // pred_region
      %s48 = ssub.s32 8192, 8192
      %49 = vsyncadd [#allocation6], %s48
      %s50 = sshll.u32 [#allocation7], 4
      %s51 = int_to_ptr.vmem [resolvable:$true] %s50
      %56 = dma.hbm_to_vmem [thread:$0]  %s3, 8192, %s51, [#allocation6], 256, 256, 16
    $region17: #{tpu_custom_call.1} parent=1 // pred_fallthru
      _
    // Predicated region
    $region18: #{tpu_custom_call.1} parent=1 // pred_check
      _
    $region19: #{tpu_custom_call.1} parent=1 // pred_check_branch
      %58 = sbr.rel (0) target = $region21
    $region20: #{tpu_custom_call.1} parent=1 // pred_region
      _
    $region21: #{tpu_custom_call.1} parent=1 // pred_fallthru
      _
    // Predicated region
    $region22: #{tpu_custom_call.1} parent=1 // pred_check
      _
    $region23: #{tpu_custom_call.1} parent=1 // pred_check_branch
      %60 = sbr.rel (0) target = $region25
    $region24: #{tpu_custom_call.1} parent=1 // pred_region
      %s62 = ssub.s32 8192, 8192
      %63 = vsyncadd [#allocation9], %s62
      %s64 = sshll.u32 [#allocation8], 4
      %s65 = int_to_ptr.vmem [resolvable:$true] %s64
      %70 = dma.hbm_to_vmem [thread:$0]  %s5, 8192, %s65, [#allocation9], 256, 256, 16
    $region25: #{tpu_custom_call.1} parent=1 // pred_fallthru
      _
    // Predicated region
    $region26: #{tpu_custom_call.1} parent=1 // pred_check
      _
    $region27: #{tpu_custom_call.1} parent=1 // pred_check_branch
      %72 = sbr.rel (0) target = $region29
    $region28: #{tpu_custom_call.1} parent=1 // pred_region
      _
    $region29: #{tpu_custom_call.1} parent=1 // pred_fallthru
      _
    // Predicated region
    $region30: #{tpu_custom_call.1} parent=1 // pred_check
      _
    $region31: #{tpu_custom_call.1} parent=1 // pred_check_branch
      %74 = sbr.rel (0) target = $region33
    $region32: #{tpu_custom_call.1} parent=1 // pred_region
      %s76 = ssub.s32 8192, 8192
      %77 = vsyncadd [#allocation9], %s76
      %s78 = sshll.u32 [#allocation10], 4
      %s79 = int_to_ptr.vmem [resolvable:$true] %s78
      %84 = dma.hbm_to_vmem [thread:$0]  %s7, 8192, %s79, [#allocation9], 256, 256, 16
    $region33: #{tpu_custom_call.1} parent=1 // pred_fallthru
      _
    // Predicated region
    $region34: #{tpu_custom_call.1} parent=1 // pred_check
      _
    $region35: #{tpu_custom_call.1} parent=1 // pred_check_branch
      %86 = sbr.rel (0) target = $region37
    $region36: #{tpu_custom_call.1} parent=1 // pred_region
      _
    $region37: #{tpu_custom_call.1} parent=1 // pred_fallthru
      _
    // Predicated region
    $region38: #{tpu_custom_call.1} parent=1 // pred_check
      _
    $region39: #{tpu_custom_call.1} parent=1 // pred_check_branch
      %88 = sbr.rel (0) target = $region41
    $region40: #{tpu_custom_call.1} parent=1 // pred_region
      %s90 = ssub.s32 4096, 4096
      %91 = vsyncadd [#allocation12], %s90
      %s92 = sshll.u32 [#allocation11], 4
      %s93 = int_to_ptr.vmem [resolvable:$true] %s92
      %98 = dma.hbm_to_vmem [thread:$0]  %s9, 4096, %s93, [#allocation12], 128, 128, 8
    $region41: #{tpu_custom_call.1} parent=1 // pred_fallthru
      _
    // Predicated region
    $region42: #{tpu_custom_call.1} parent=1 // pred_check
      _
    $region43: #{tpu_custom_call.1} parent=1 // pred_check_branch
      %100 = sbr.rel (0) target = $region45
    $region44: #{tpu_custom_call.1} parent=1 // pred_region
      _
    $region45: #{tpu_custom_call.1} parent=1 // pred_fallthru
      _
    // Predicated region
    $region46: #{tpu_custom_call.1} parent=1 // pred_check
      _
    $region47: #{tpu_custom_call.1} parent=1 // pred_check_branch
      %102 = sbr.rel (0) target = $region49
    $region48: #{tpu_custom_call.1} parent=1 // pred_region
      %103 = dma.done [#allocation3], 128
    $region49: #{tpu_custom_call.1} parent=1 // pred_fallthru
      _
    // Predicated region
    $region50: #{tpu_custom_call.1} parent=1 // pred_check
      _
    $region51: #{tpu_custom_call.1} parent=1 // pred_check_branch
      %105 = sbr.rel (0) target = $region53
    $region52: #{tpu_custom_call.1} parent=1 // pred_region
      %106 = dma.done [#allocation6], 1024
    $region53: #{tpu_custom_call.1} parent=1 // pred_fallthru
      _
    // Predicated region
    $region54: #{tpu_custom_call.1} parent=1 // pred_check
      _
    $region55: #{tpu_custom_call.1} parent=1 // pred_check_branch
      %108 = sbr.rel (0) target = $region57
    $region56: #{tpu_custom_call.1} parent=1 // pred_region
      %109 = dma.done [#allocation6], 8192
    $region57: #{tpu_custom_call.1} parent=1 // pred_fallthru
      _
    // Predicated region
    $region58: #{tpu_custom_call.1} parent=1 // pred_check
      _
    $region59: #{tpu_custom_call.1} parent=1 // pred_check_branch
      %111 = sbr.rel (0) target = $region61
    $region60: #{tpu_custom_call.1} parent=1 // pred_region
      %112 = dma.done [#allocation9], 8192
    $region61: #{tpu_custom_call.1} parent=1 // pred_fallthru
      _
    // Predicated region
    $region62: #{tpu_custom_call.1} parent=1 // pred_check
      _
    $region63: #{tpu_custom_call.1} parent=1 // pred_check_branch
      %114 = sbr.rel (0) target = $region65
    $region64: #{tpu_custom_call.1} parent=1 // pred_region
      %115 = dma.done [#allocation9], 8192
    $region65: #{tpu_custom_call.1} parent=1 // pred_fallthru
      _
    // Predicated region
    $region66: #{tpu_custom_call.1} parent=1 // pred_check
      _
    $region67: #{tpu_custom_call.1} parent=1 // pred_check_branch
      %117 = sbr.rel (0) target = $region69
    $region68: #{tpu_custom_call.1} parent=1 // pred_region
      %118 = dma.done [#allocation12], 4096
    $region69: #{tpu_custom_call.1} parent=1 // pred_fallthru
      _
    %v119 = vld [vmem:[#allocation2] sm:$0xff]
    %v120 = vld [vmem:[#allocation5] sm:$0xff]
    %v121 = vld [vmem:[#allocation5 + $0x8] sm:$0xff]
    %v122 = vld [vmem:[#allocation5 + $0x10] sm:$0xff]
    %v123 = vld [vmem:[#allocation5 + $0x18] sm:$0xff]
    %v124 = vld [vmem:[#allocation5 + $0x20] sm:$0xff]
    %v125 = vld [vmem:[#allocation5 + $0x28] sm:$0xff]
    %v126 = vld [vmem:[#allocation5 + $0x30] sm:$0xff]
    %v127 = vld [vmem:[#allocation5 + $0x38] sm:$0xff]
    %v128 = vld [vmem:[%s2] sm:$0x3]
    %v130 = vlaneseq
    %v131 = vshrl.u32 %v130, 7
    %v132 = vsub.s32 0, %v131
    %v133 = vrot.slane %v128, %v132
    %v134 = vlaneseq
    %v135 = vshrl.u32 %v134, 7
    %v136 = vsub.s32 1, %v135
    %v137 = vrot.slane %v128, %v136
    %vm140 = vcmask 261120
    %v142 = vsel %vm140, %v119, 0
    %144 = vmatprep.subr.mxu0 0.0
    %145 = vmatpush1.msra.mxu0 0.0
    %146 = vmatprep.subr.mxu0 0.0
    %147 = vmatpush1.msra.mxu0 0.0
    %148 = vmatprep.subr.mxu0 0.0
    %149 = vmatpush1.msra.mxu0 0.0
    %150 = vmatprep.subr.mxu0 0.0
    %151 = vmatpush1.msra.mxu0 0.0
    %152 = vmatprep.subr.mxu0 0.0
    %153 = vmatpush1.msra.mxu0 0.0
    %154 = vmatprep.subr.mxu0 0.0
    %155 = vmatpush1.msra.mxu0 0.0
    %156 = vmatprep.subr.mxu0 0.0
    %157 = vmatpush1.msra.mxu0 0.0
    %158 = vmatprep.subr.mxu0 0.0
    %159 = vmatpush1.msra.mxu0 0.0
    %160 = vmatprep.subr.mxu0 0.0
    %161 = vmatpush1.msra.mxu0 0.0
    %162 = vmatprep.subr.mxu0 0.0
    %163 = vmatpush1.msra.mxu0 0.0
    %164 = vmatprep.subr.mxu0 0.0
    %165 = vmatpush1.msra.mxu0 0.0
    %166 = vmatprep.subr.mxu0 0.0
    %167 = vmatpush1.msra.mxu0 0.0
    %168 = vmatprep.subr.mxu0 %v127
    %169 = vmatpush1.msra.mxu0 %v126
    %170 = vmatprep.subr.mxu0 %v125
    %171 = vmatpush1.msra.mxu0 %v124
    %172 = vmatprep.subr.mxu0 %v123
    %173 = vmatpush1.msra.mxu0 %v122
    %174 = vmatprep.subr.mxu0 %v121
    %175 = vmatpush1.msra.mxu0 %v120
    %176 = vmatprep.subr.mxu0 0.0
    %177 = vmatpush2.msra.mxu0 0.0
    %178 = vmatprep.subr.mxu0 0.0
    %179 = vmatpush2.msra.mxu0 0.0
    %180 = vmatprep.subr.mxu0 0.0
    %181 = vmatpush2.msra.mxu0 0.0
    %182 = vmatprep.subr.mxu0 0.0
    %183 = vmatpush2.msra.mxu0 0.0
    %184 = vmatprep.subr.mxu0 0.0
    %185 = vmatpush2.msra.mxu0 0.0
    %186 = vmatprep.subr.mxu0 0.0
    %187 = vmatpush2.msra.mxu0 0.0
    %188 = vmatprep.subr.mxu0 0.0
    %189 = vmatpush2.msra.mxu0 0.0
    %190 = vmatprep.subr.mxu0 0.0
    %191 = vmatpush2.msra.mxu0 0.0
    %192 = vmatprep.subr.mxu0 0.0
    %193 = vmatpush2.msra.mxu0 0.0
    %194 = vmatprep.subr.mxu0 0.0
    %195 = vmatpush2.msra.mxu0 0.0
    %196 = vmatprep.subr.mxu0 0.0
    %197 = vmatpush2.msra.mxu0 0.0
    %198 = vmatprep.subr.mxu0 0.0
    %199 = vmatpush2.msra.mxu0 0.0
    %200 = vmatprep.subr.mxu0 0.0
    %201 = vmatpush2.msra.mxu0 0.0
    %202 = vmatprep.subr.mxu0 0.0
    %203 = vmatpush2.msra.mxu0 0.0
    %204 = vmatprep.subr.mxu0 0.0
    %205 = vmatpush2.msra.mxu0 0.0
    %206 = vmatprep.subr.mxu0 0.0
    %207 = vmatpush2.msra.mxu0 0.0
    %208 = vmatprep.mubr.f32.mxu0 0.0
    %209 = vmatmul.mubr.f32.gmra.mxu0 %v142
    %v210 = vpop.f32.mrf.mxu0
    %v211 = vadd.f32 %v133, %v210
    %v212 = vpop.f32.mrf.mxu0
    %v213 = vadd.f32 %v137, %v212
    %214 = vdwg.mxu0
    %v215 = vld [vmem:[#allocation7] sm:$0xff]
    %v216 = vld [vmem:[#allocation7 + $0x8] sm:$0xff]
    %v217 = vld [vmem:[#allocation7 + $0x10] sm:$0xff]
    %v218 = vld [vmem:[#allocation7 + $0x18] sm:$0xff]
    %v219 = vld [vmem:[#allocation7 + $0x20] sm:$0xff]
    %v220 = vld [vmem:[#allocation7 + $0x28] sm:$0xff]
    %v221 = vld [vmem:[#allocation7 + $0x30] sm:$0xff]
    %v222 = vld [vmem:[#allocation7 + $0x38] sm:$0xff]
    %v223 = vld [vmem:[#allocation7 + $0x40] sm:$0xff]
    %v224 = vld [vmem:[#allocation7 + $0x48] sm:$0xff]
    %v225 = vld [vmem:[#allocation7 + $0x50] sm:$0xff]
    %v226 = vld [vmem:[#allocation7 + $0x58] sm:$0xff]
    %v227 = vld [vmem:[#allocation7 + $0x60] sm:$0xff]
    %v228 = vld [vmem:[#allocation7 + $0x68] sm:$0xff]
    %v229 = vld [vmem:[#allocation7 + $0x70] sm:$0xff]
    %v230 = vld [vmem:[#allocation7 + $0x78] sm:$0xff]
    %v231 = vld [vmem:[#allocation7 + $0x80] sm:$0xff]
    %v232 = vld [vmem:[#allocation7 + $0x88] sm:$0xff]
    %v233 = vld [vmem:[#allocation7 + $0x90] sm:$0xff]
    %v234 = vld [vmem:[#allocation7 + $0x98] sm:$0xff]
    %v235 = vld [vmem:[#allocation7 + $0xa0] sm:$0xff]
    %v236 = vld [vmem:[#allocation7 + $0xa8] sm:$0xff]
    %v237 = vld [vmem:[#allocation7 + $0xb0] sm:$0xff]
    %v238 = vld [vmem:[#allocation7 + $0xb8] sm:$0xff]
    %v239 = vld [vmem:[#allocation7 + $0xc0] sm:$0xff]
    %v240 = vld [vmem:[#allocation7 + $0xc8] sm:$0xff]
    %v241 = vld [vmem:[#allocation7 + $0xd0] sm:$0xff]
    %v242 = vld [vmem:[#allocation7 + $0xd8] sm:$0xff]
    %v243 = vld [vmem:[#allocation7 + $0xe0] sm:$0xff]
    %v244 = vld [vmem:[#allocation7 + $0xe8] sm:$0xff]
    %v245 = vld [vmem:[#allocation7 + $0xf0] sm:$0xff]
    %v246 = vld [vmem:[#allocation7 + $0xf8] sm:$0xff]
    %v247 = vld [vmem:[#allocation7 + $0x100] sm:$0xff]
    %v248 = vld [vmem:[#allocation7 + $0x108] sm:$0xff]
    %v249 = vld [vmem:[#allocation7 + $0x110] sm:$0xff]
    %v250 = vld [vmem:[#allocation7 + $0x118] sm:$0xff]
    %v251 = vld [vmem:[#allocation7 + $0x120] sm:$0xff]
    %v252 = vld [vmem:[#allocation7 + $0x128] sm:$0xff]
    %v253 = vld [vmem:[#allocation7 + $0x130] sm:$0xff]
    %v254 = vld [vmem:[#allocation7 + $0x138] sm:$0xff]
    %v255 = vld [vmem:[#allocation7 + $0x140] sm:$0xff]
    %v256 = vld [vmem:[#allocation7 + $0x148] sm:$0xff]
    %v257 = vld [vmem:[#allocation7 + $0x150] sm:$0xff]
    %v258 = vld [vmem:[#allocation7 + $0x158] sm:$0xff]
    %v259 = vld [vmem:[#allocation7 + $0x160] sm:$0xff]
    %v260 = vld [vmem:[#allocation7 + $0x168] sm:$0xff]
    %v261 = vld [vmem:[#allocation7 + $0x170] sm:$0xff]
    %v262 = vld [vmem:[#allocation7 + $0x178] sm:$0xff]
    %v263 = vld [vmem:[#allocation7 + $0x180] sm:$0xff]
    %v264 = vld [vmem:[#allocation7 + $0x188] sm:$0xff]
    %v265 = vld [vmem:[#allocation7 + $0x190] sm:$0xff]
    %v266 = vld [vmem:[#allocation7 + $0x198] sm:$0xff]
    %v267 = vld [vmem:[#allocation7 + $0x1a0] sm:$0xff]
    %v268 = vld [vmem:[#allocation7 + $0x1a8] sm:$0xff]
    %v269 = vld [vmem:[#allocation7 + $0x1b0] sm:$0xff]
    %v270 = vld [vmem:[#allocation7 + $0x1b8] sm:$0xff]
    %v271 = vld [vmem:[#allocation7 + $0x1c0] sm:$0xff]
    %v272 = vld [vmem:[#allocation7 + $0x1c8] sm:$0xff]
    %v273 = vld [vmem:[#allocation7 + $0x1d0] sm:$0xff]
    %v274 = vld [vmem:[#allocation7 + $0x1d8] sm:$0xff]
    %v275 = vld [vmem:[#allocation7 + $0x1e0] sm:$0xff]
    %v276 = vld [vmem:[#allocation7 + $0x1e8] sm:$0xff]
    %v277 = vld [vmem:[#allocation7 + $0x1f0] sm:$0xff]
    %v278 = vld [vmem:[#allocation7 + $0x1f8] sm:$0xff]
    %v279 = vld [vmem:[%s4] sm:$0x3]
    %v281 = vlaneseq
    %v282 = vshrl.u32 %v281, 7
    %v283 = vsub.s32 0, %v282
    %v284 = vrot.slane %v279, %v283
    %v285 = vlaneseq
    %v286 = vshrl.u32 %v285, 7
    %v287 = vsub.s32 1, %v286
    %v288 = vrot.slane %v279, %v287
    %291 = vmatprep.subr.mxu0 %v246
    %292 = vmatpush1.msra.mxu0 %v245
    %293 = vmatprep.subr.mxu0 %v244
    %294 = vmatpush1.msra.mxu0 %v243
    %295 = vmatprep.subr.mxu0 %v242
    %296 = vmatpush1.msra.mxu0 %v241
    %297 = vmatprep.subr.mxu0 %v240
    %298 = vmatpush1.msra.mxu0 %v239
    %299 = vmatprep.subr.mxu0 %v238
    %300 = vmatpush1.msra.mxu0 %v237
    %301 = vmatprep.subr.mxu0 %v236
    %302 = vmatpush1.msra.mxu0 %v235
    %303 = vmatprep.subr.mxu0 %v234
    %304 = vmatpush1.msra.mxu0 %v233
    %305 = vmatprep.subr.mxu0 %v232
    %306 = vmatpush1.msra.mxu0 %v231
    %307 = vmatprep.subr.mxu0 %v230
    %308 = vmatpush1.msra.mxu0 %v229
    %309 = vmatprep.subr.mxu0 %v228
    %310 = vmatpush1.msra.mxu0 %v227
    %311 = vmatprep.subr.mxu0 %v226
    %312 = vmatpush1.msra.mxu0 %v225
    %313 = vmatprep.subr.mxu0 %v224
    %314 = vmatpush1.msra.mxu0 %v223
    %315 = vmatprep.subr.mxu0 %v222
    %316 = vmatpush1.msra.mxu0 %v221
    %317 = vmatprep.subr.mxu0 %v220
    %318 = vmatpush1.msra.mxu0 %v219
    %319 = vmatprep.subr.mxu0 %v218
    %320 = vmatpush1.msra.mxu0 %v217
    %321 = vmatprep.subr.mxu0 %v216
    %322 = vmatpush1.msra.mxu0 %v215
    %323 = vmatprep.subr.mxu0 %v278
    %324 = vmatpush2.msra.mxu0 %v277
    %325 = vmatprep.subr.mxu0 %v276
    %326 = vmatpush2.msra.mxu0 %v275
    %327 = vmatprep.subr.mxu0 %v274
    %328 = vmatpush2.msra.mxu0 %v273
    %329 = vmatprep.subr.mxu0 %v272
    %330 = vmatpush2.msra.mxu0 %v271
    %331 = vmatprep.subr.mxu0 %v270
    %332 = vmatpush2.msra.mxu0 %v269
    %333 = vmatprep.subr.mxu0 %v268
    %334 = vmatpush2.msra.mxu0 %v267
    %335 = vmatprep.subr.mxu0 %v266
    %336 = vmatpush2.msra.mxu0 %v265
    %337 = vmatprep.subr.mxu0 %v264
    %338 = vmatpush2.msra.mxu0 %v263
    %339 = vmatprep.subr.mxu0 %v262
    %340 = vmatpush2.msra.mxu0 %v261
    %341 = vmatprep.subr.mxu0 %v260
    %342 = vmatpush2.msra.mxu0 %v259
    %343 = vmatprep.subr.mxu0 %v258
    %344 = vmatpush2.msra.mxu0 %v257
    %345 = vmatprep.subr.mxu0 %v256
    %346 = vmatpush2.msra.mxu0 %v255
    %347 = vmatprep.subr.mxu0 %v254
    %348 = vmatpush2.msra.mxu0 %v253
    %349 = vmatprep.subr.mxu0 %v252
    %350 = vmatpush2.msra.mxu0 %v251
    %351 = vmatprep.subr.mxu0 %v250
    %352 = vmatpush2.msra.mxu0 %v249
    %353 = vmatprep.subr.mxu0 %v248
    %354 = vmatpush2.msra.mxu0 %v247
    %355 = vmatprep.mubr.f32.mxu0 %v213
    %356 = vmatmul.mubr.f32.gmra.mxu0 %v211
    %v357 = vpop.f32.mrf.mxu0
    %v358 = vadd.f32 %v284, %v357
    %v359 = vpop.f32.mrf.mxu0
    %v360 = vadd.f32 %v288, %v359
    %361 = vdwg.mxu0
    %v362 = vld [vmem:[#allocation8] sm:$0xff]
    %v363 = vld [vmem:[#allocation8 + $0x8] sm:$0xff]
    %v364 = vld [vmem:[#allocation8 + $0x10] sm:$0xff]
    %v365 = vld [vmem:[#allocation8 + $0x18] sm:$0xff]
    %v366 = vld [vmem:[#allocation8 + $0x20] sm:$0xff]
    %v367 = vld [vmem:[#allocation8 + $0x28] sm:$0xff]
    %v368 = vld [vmem:[#allocation8 + $0x30] sm:$0xff]
    %v369 = vld [vmem:[#allocation8 + $0x38] sm:$0xff]
    %v370 = vld [vmem:[#allocation8 + $0x40] sm:$0xff]
    %v371 = vld [vmem:[#allocation8 + $0x48] sm:$0xff]
    %v372 = vld [vmem:[#allocation8 + $0x50] sm:$0xff]
    %v373 = vld [vmem:[#allocation8 + $0x58] sm:$0xff]
    %v374 = vld [vmem:[#allocation8 + $0x60] sm:$0xff]
    %v375 = vld [vmem:[#allocation8 + $0x68] sm:$0xff]
    %v376 = vld [vmem:[#allocation8 + $0x70] sm:$0xff]
    %v377 = vld [vmem:[#allocation8 + $0x78] sm:$0xff]
    %v378 = vld [vmem:[#allocation8 + $0x80] sm:$0xff]
    %v379 = vld [vmem:[#allocation8 + $0x88] sm:$0xff]
    %v380 = vld [vmem:[#allocation8 + $0x90] sm:$0xff]
    %v381 = vld [vmem:[#allocation8 + $0x98] sm:$0xff]
    %v382 = vld [vmem:[#allocation8 + $0xa0] sm:$0xff]
    %v383 = vld [vmem:[#allocation8 + $0xa8] sm:$0xff]
    %v384 = vld [vmem:[#allocation8 + $0xb0] sm:$0xff]
    %v385 = vld [vmem:[#allocation8 + $0xb8] sm:$0xff]
    %v386 = vld [vmem:[#allocation8 + $0xc0] sm:$0xff]
    %v387 = vld [vmem:[#allocation8 + $0xc8] sm:$0xff]
    %v388 = vld [vmem:[#allocation8 + $0xd0] sm:$0xff]
    %v389 = vld [vmem:[#allocation8 + $0xd8] sm:$0xff]
    %v390 = vld [vmem:[#allocation8 + $0xe0] sm:$0xff]
    %v391 = vld [vmem:[#allocation8 + $0xe8] sm:$0xff]
    %v392 = vld [vmem:[#allocation8 + $0xf0] sm:$0xff]
    %v393 = vld [vmem:[#allocation8 + $0xf8] sm:$0xff]
    %v394 = vld [vmem:[#allocation8 + $0x100] sm:$0xff]
    %v395 = vld [vmem:[#allocation8 + $0x108] sm:$0xff]
    %v396 = vld [vmem:[#allocation8 + $0x110] sm:$0xff]
    %v397 = vld [vmem:[#allocation8 + $0x118] sm:$0xff]
    %v398 = vld [vmem:[#allocation8 + $0x120] sm:$0xff]
    %v399 = vld [vmem:[#allocation8 + $0x128] sm:$0xff]
    %v400 = vld [vmem:[#allocation8 + $0x130] sm:$0xff]
    %v401 = vld [vmem:[#allocation8 + $0x138] sm:$0xff]
    %v402 = vld [vmem:[#allocation8 + $0x140] sm:$0xff]
    %v403 = vld [vmem:[#allocation8 + $0x148] sm:$0xff]
    %v404 = vld [vmem:[#allocation8 + $0x150] sm:$0xff]
    %v405 = vld [vmem:[#allocation8 + $0x158] sm:$0xff]
    %v406 = vld [vmem:[#allocation8 + $0x160] sm:$0xff]
    %v407 = vld [vmem:[#allocation8 + $0x168] sm:$0xff]
    %v408 = vld [vmem:[#allocation8 + $0x170] sm:$0xff]
    %v409 = vld [vmem:[#allocation8 + $0x178] sm:$0xff]
    %v410 = vld [vmem:[#allocation8 + $0x180] sm:$0xff]
    %v411 = vld [vmem:[#allocation8 + $0x188] sm:$0xff]
    %v412 = vld [vmem:[#allocation8 + $0x190] sm:$0xff]
    %v413 = vld [vmem:[#allocation8 + $0x198] sm:$0xff]
    %v414 = vld [vmem:[#allocation8 + $0x1a0] sm:$0xff]
    %v415 = vld [vmem:[#allocation8 + $0x1a8] sm:$0xff]
    %v416 = vld [vmem:[#allocation8 + $0x1b0] sm:$0xff]
    %v417 = vld [vmem:[#allocation8 + $0x1b8] sm:$0xff]
    %v418 = vld [vmem:[#allocation8 + $0x1c0] sm:$0xff]
    %v419 = vld [vmem:[#allocation8 + $0x1c8] sm:$0xff]
    %v420 = vld [vmem:[#allocation8 + $0x1d0] sm:$0xff]
    %v421 = vld [vmem:[#allocation8 + $0x1d8] sm:$0xff]
    %v422 = vld [vmem:[#allocation8 + $0x1e0] sm:$0xff]
    %v423 = vld [vmem:[#allocation8 + $0x1e8] sm:$0xff]
    %v424 = vld [vmem:[#allocation8 + $0x1f0] sm:$0xff]
    %v425 = vld [vmem:[#allocation8 + $0x1f8] sm:$0xff]
    %v426 = vld [vmem:[%s6] sm:$0x3]
    %v428 = vlaneseq
    %v429 = vshrl.u32 %v428, 7
    %v430 = vsub.s32 0, %v429
    %v431 = vrot.slane %v426, %v430
    %v432 = vlaneseq
    %v433 = vshrl.u32 %v432, 7
    %v434 = vsub.s32 1, %v433
    %v435 = vrot.slane %v426, %v434
    %438 = vmatprep.subr.mxu0 %v393
    %439 = vmatpush1.msra.mxu0 %v392
    %440 = vmatprep.subr.mxu0 %v391
    %441 = vmatpush1.msra.mxu0 %v390
    %442 = vmatprep.subr.mxu0 %v389
    %443 = vmatpush1.msra.mxu0 %v388
    %444 = vmatprep.subr.mxu0 %v387
    %445 = vmatpush1.msra.mxu0 %v386
    %446 = vmatprep.subr.mxu0 %v385
    %447 = vmatpush1.msra.mxu0 %v384
    %448 = vmatprep.subr.mxu0 %v383
    %449 = vmatpush1.msra.mxu0 %v382
    %450 = vmatprep.subr.mxu0 %v381
    %451 = vmatpush1.msra.mxu0 %v380
    %452 = vmatprep.subr.mxu0 %v379
    %453 = vmatpush1.msra.mxu0 %v378
    %454 = vmatprep.subr.mxu0 %v377
    %455 = vmatpush1.msra.mxu0 %v376
    %456 = vmatprep.subr.mxu0 %v375
    %457 = vmatpush1.msra.mxu0 %v374
    %458 = vmatprep.subr.mxu0 %v373
    %459 = vmatpush1.msra.mxu0 %v372
    %460 = vmatprep.subr.mxu0 %v371
    %461 = vmatpush1.msra.mxu0 %v370
    %462 = vmatprep.subr.mxu0 %v369
    %463 = vmatpush1.msra.mxu0 %v368
    %464 = vmatprep.subr.mxu0 %v367
    %465 = vmatpush1.msra.mxu0 %v366
    %466 = vmatprep.subr.mxu0 %v365
    %467 = vmatpush1.msra.mxu0 %v364
    %468 = vmatprep.subr.mxu0 %v363
    %469 = vmatpush1.msra.mxu0 %v362
    %470 = vmatprep.subr.mxu0 %v425
    %471 = vmatpush2.msra.mxu0 %v424
    %472 = vmatprep.subr.mxu0 %v423
    %473 = vmatpush2.msra.mxu0 %v422
    %474 = vmatprep.subr.mxu0 %v421
    %475 = vmatpush2.msra.mxu0 %v420
    %476 = vmatprep.subr.mxu0 %v419
    %477 = vmatpush2.msra.mxu0 %v418
    %478 = vmatprep.subr.mxu0 %v417
    %479 = vmatpush2.msra.mxu0 %v416
    %480 = vmatprep.subr.mxu0 %v415
    %481 = vmatpush2.msra.mxu0 %v414
    %482 = vmatprep.subr.mxu0 %v413
    %483 = vmatpush2.msra.mxu0 %v412
    %484 = vmatprep.subr.mxu0 %v411
    %485 = vmatpush2.msra.mxu0 %v410
    %486 = vmatprep.subr.mxu0 %v409
    %487 = vmatpush2.msra.mxu0 %v408
    %488 = vmatprep.subr.mxu0 %v407
    %489 = vmatpush2.msra.mxu0 %v406
    %490 = vmatprep.subr.mxu0 %v405
    %491 = vmatpush2.msra.mxu0 %v404
    %492 = vmatprep.subr.mxu0 %v403
    %493 = vmatpush2.msra.mxu0 %v402
    %494 = vmatprep.subr.mxu0 %v401
    %495 = vmatpush2.msra.mxu0 %v400
    %496 = vmatprep.subr.mxu0 %v399
    %497 = vmatpush2.msra.mxu0 %v398
    %498 = vmatprep.subr.mxu0 %v397
    %499 = vmatpush2.msra.mxu0 %v396
    %500 = vmatprep.subr.mxu0 %v395
    %501 = vmatpush2.msra.mxu0 %v394
    %502 = vmatprep.mubr.f32.mxu0 %v360
    %503 = vmatmul.mubr.f32.gmra.mxu0 %v358
    %v504 = vpop.f32.mrf.mxu0
    %v505 = vadd.f32 %v431, %v504
    %v506 = vpop.f32.mrf.mxu0
    %v507 = vadd.f32 %v435, %v506
    %508 = vdwg.mxu0
    %v509 = vld [vmem:[#allocation10] sm:$0xff]
    %v510 = vld [vmem:[#allocation10 + $0x8] sm:$0xff]
    %v511 = vld [vmem:[#allocation10 + $0x10] sm:$0xff]
    %v512 = vld [vmem:[#allocation10 + $0x18] sm:$0xff]
    %v513 = vld [vmem:[#allocation10 + $0x20] sm:$0xff]
    %v514 = vld [vmem:[#allocation10 + $0x28] sm:$0xff]
    %v515 = vld [vmem:[#allocation10 + $0x30] sm:$0xff]
    %v516 = vld [vmem:[#allocation10 + $0x38] sm:$0xff]
    %v517 = vld [vmem:[#allocation10 + $0x40] sm:$0xff]
    %v518 = vld [vmem:[#allocation10 + $0x48] sm:$0xff]
    %v519 = vld [vmem:[#allocation10 + $0x50] sm:$0xff]
    %v520 = vld [vmem:[#allocation10 + $0x58] sm:$0xff]
    %v521 = vld [vmem:[#allocation10 + $0x60] sm:$0xff]
    %v522 = vld [vmem:[#allocation10 + $0x68] sm:$0xff]
    %v523 = vld [vmem:[#allocation10 + $0x70] sm:$0xff]
    %v524 = vld [vmem:[#allocation10 + $0x78] sm:$0xff]
    %v525 = vld [vmem:[#allocation10 + $0x80] sm:$0xff]
    %v526 = vld [vmem:[#allocation10 + $0x88] sm:$0xff]
    %v527 = vld [vmem:[#allocation10 + $0x90] sm:$0xff]
    %v528 = vld [vmem:[#allocation10 + $0x98] sm:$0xff]
    %v529 = vld [vmem:[#allocation10 + $0xa0] sm:$0xff]
    %v530 = vld [vmem:[#allocation10 + $0xa8] sm:$0xff]
    %v531 = vld [vmem:[#allocation10 + $0xb0] sm:$0xff]
    %v532 = vld [vmem:[#allocation10 + $0xb8] sm:$0xff]
    %v533 = vld [vmem:[#allocation10 + $0xc0] sm:$0xff]
    %v534 = vld [vmem:[#allocation10 + $0xc8] sm:$0xff]
    %v535 = vld [vmem:[#allocation10 + $0xd0] sm:$0xff]
    %v536 = vld [vmem:[#allocation10 + $0xd8] sm:$0xff]
    %v537 = vld [vmem:[#allocation10 + $0xe0] sm:$0xff]
    %v538 = vld [vmem:[#allocation10 + $0xe8] sm:$0xff]
    %v539 = vld [vmem:[#allocation10 + $0xf0] sm:$0xff]
    %v540 = vld [vmem:[#allocation10 + $0xf8] sm:$0xff]
    %v541 = vld [vmem:[#allocation10 + $0x100] sm:$0xff]
    %v542 = vld [vmem:[#allocation10 + $0x108] sm:$0xff]
    %v543 = vld [vmem:[#allocation10 + $0x110] sm:$0xff]
    %v544 = vld [vmem:[#allocation10 + $0x118] sm:$0xff]
    %v545 = vld [vmem:[#allocation10 + $0x120] sm:$0xff]
    %v546 = vld [vmem:[#allocation10 + $0x128] sm:$0xff]
    %v547 = vld [vmem:[#allocation10 + $0x130] sm:$0xff]
    %v548 = vld [vmem:[#allocation10 + $0x138] sm:$0xff]
    %v549 = vld [vmem:[#allocation10 + $0x140] sm:$0xff]
    %v550 = vld [vmem:[#allocation10 + $0x148] sm:$0xff]
    %v551 = vld [vmem:[#allocation10 + $0x150] sm:$0xff]
    %v552 = vld [vmem:[#allocation10 + $0x158] sm:$0xff]
    %v553 = vld [vmem:[#allocation10 + $0x160] sm:$0xff]
    %v554 = vld [vmem:[#allocation10 + $0x168] sm:$0xff]
    %v555 = vld [vmem:[#allocation10 + $0x170] sm:$0xff]
    %v556 = vld [vmem:[#allocation10 + $0x178] sm:$0xff]
    %v557 = vld [vmem:[#allocation10 + $0x180] sm:$0xff]
    %v558 = vld [vmem:[#allocation10 + $0x188] sm:$0xff]
    %v559 = vld [vmem:[#allocation10 + $0x190] sm:$0xff]
    %v560 = vld [vmem:[#allocation10 + $0x198] sm:$0xff]
    %v561 = vld [vmem:[#allocation10 + $0x1a0] sm:$0xff]
    %v562 = vld [vmem:[#allocation10 + $0x1a8] sm:$0xff]
    %v563 = vld [vmem:[#allocation10 + $0x1b0] sm:$0xff]
    %v564 = vld [vmem:[#allocation10 + $0x1b8] sm:$0xff]
    %v565 = vld [vmem:[#allocation10 + $0x1c0] sm:$0xff]
    %v566 = vld [vmem:[#allocation10 + $0x1c8] sm:$0xff]
    %v567 = vld [vmem:[#allocation10 + $0x1d0] sm:$0xff]
    %v568 = vld [vmem:[#allocation10 + $0x1d8] sm:$0xff]
    %v569 = vld [vmem:[#allocation10 + $0x1e0] sm:$0xff]
    %v570 = vld [vmem:[#allocation10 + $0x1e8] sm:$0xff]
    %v571 = vld [vmem:[#allocation10 + $0x1f0] sm:$0xff]
    %v572 = vld [vmem:[#allocation10 + $0x1f8] sm:$0xff]
    %v573 = vld [vmem:[%s8] sm:$0x3]
    %v575 = vlaneseq
    %v576 = vshrl.u32 %v575, 7
    %v577 = vsub.s32 0, %v576
    %v578 = vrot.slane %v573, %v577
    %v579 = vlaneseq
    %v580 = vshrl.u32 %v579, 7
    %v581 = vsub.s32 1, %v580
    %v582 = vrot.slane %v573, %v581
    %585 = vmatprep.subr.mxu0 %v540
    %586 = vmatpush1.msra.mxu0 %v539
    %587 = vmatprep.subr.mxu0 %v538
    %588 = vmatpush1.msra.mxu0 %v537
    %589 = vmatprep.subr.mxu0 %v536
    %590 = vmatpush1.msra.mxu0 %v535
    %591 = vmatprep.subr.mxu0 %v534
    %592 = vmatpush1.msra.mxu0 %v533
    %593 = vmatprep.subr.mxu0 %v532
    %594 = vmatpush1.msra.mxu0 %v531
    %595 = vmatprep.subr.mxu0 %v530
    %596 = vmatpush1.msra.mxu0 %v529
    %597 = vmatprep.subr.mxu0 %v528
    %598 = vmatpush1.msra.mxu0 %v527
    %599 = vmatprep.subr.mxu0 %v526
    %600 = vmatpush1.msra.mxu0 %v525
    %601 = vmatprep.subr.mxu0 %v524
    %602 = vmatpush1.msra.mxu0 %v523
    %603 = vmatprep.subr.mxu0 %v522
    %604 = vmatpush1.msra.mxu0 %v521
    %605 = vmatprep.subr.mxu0 %v520
    %606 = vmatpush1.msra.mxu0 %v519
    %607 = vmatprep.subr.mxu0 %v518
    %608 = vmatpush1.msra.mxu0 %v517
    %609 = vmatprep.subr.mxu0 %v516
    %610 = vmatpush1.msra.mxu0 %v515
    %611 = vmatprep.subr.mxu0 %v514
    %612 = vmatpush1.msra.mxu0 %v513
    %613 = vmatprep.subr.mxu0 %v512
    %614 = vmatpush1.msra.mxu0 %v511
    %615 = vmatprep.subr.mxu0 %v510
    %616 = vmatpush1.msra.mxu0 %v509
    %617 = vmatprep.subr.mxu0 %v572
    %618 = vmatpush2.msra.mxu0 %v571
    %619 = vmatprep.subr.mxu0 %v570
    %620 = vmatpush2.msra.mxu0 %v569
    %621 = vmatprep.subr.mxu0 %v568
    %622 = vmatpush2.msra.mxu0 %v567
    %623 = vmatprep.subr.mxu0 %v566
    %624 = vmatpush2.msra.mxu0 %v565
    %625 = vmatprep.subr.mxu0 %v564
    %626 = vmatpush2.msra.mxu0 %v563
    %627 = vmatprep.subr.mxu0 %v562
    %628 = vmatpush2.msra.mxu0 %v561
    %629 = vmatprep.subr.mxu0 %v560
    %630 = vmatpush2.msra.mxu0 %v559
    %631 = vmatprep.subr.mxu0 %v558
    %632 = vmatpush2.msra.mxu0 %v557
    %633 = vmatprep.subr.mxu0 %v556
    %634 = vmatpush2.msra.mxu0 %v555
    %635 = vmatprep.subr.mxu0 %v554
    %636 = vmatpush2.msra.mxu0 %v553
    %637 = vmatprep.subr.mxu0 %v552
    %638 = vmatpush2.msra.mxu0 %v551
    %639 = vmatprep.subr.mxu0 %v550
    %640 = vmatpush2.msra.mxu0 %v549
    %641 = vmatprep.subr.mxu0 %v548
    %642 = vmatpush2.msra.mxu0 %v547
    %643 = vmatprep.subr.mxu0 %v546
    %644 = vmatpush2.msra.mxu0 %v545
    %645 = vmatprep.subr.mxu0 %v544
    %646 = vmatpush2.msra.mxu0 %v543
    %647 = vmatprep.subr.mxu0 %v542
    %648 = vmatpush2.msra.mxu0 %v541
    %649 = vmatprep.mubr.f32.mxu0 %v507
    %650 = vmatmul.mubr.f32.gmra.mxu0 %v505
    %v651 = vpop.f32.mrf.mxu0
    %v652 = vadd.f32 %v578, %v651
    %v653 = vpop.f32.mrf.mxu0
    %v654 = vadd.f32 %v582, %v653
    %655 = vdwg.mxu0
    %v656 = vld [vmem:[#allocation11] sm:$0xff]
    %v657 = vld [vmem:[#allocation11 + $0x8] sm:$0xff]
    %v658 = vld [vmem:[#allocation11 + $0x10] sm:$0xff]
    %v659 = vld [vmem:[#allocation11 + $0x18] sm:$0xff]
    %v660 = vld [vmem:[#allocation11 + $0x20] sm:$0xff]
    %v661 = vld [vmem:[#allocation11 + $0x28] sm:$0xff]
    %v662 = vld [vmem:[#allocation11 + $0x30] sm:$0xff]
    %v663 = vld [vmem:[#allocation11 + $0x38] sm:$0xff]
    %v664 = vld [vmem:[#allocation11 + $0x40] sm:$0xff]
    %v665 = vld [vmem:[#allocation11 + $0x48] sm:$0xff]
    %v666 = vld [vmem:[#allocation11 + $0x50] sm:$0xff]
    %v667 = vld [vmem:[#allocation11 + $0x58] sm:$0xff]
    %v668 = vld [vmem:[#allocation11 + $0x60] sm:$0xff]
    %v669 = vld [vmem:[#allocation11 + $0x68] sm:$0xff]
    %v670 = vld [vmem:[#allocation11 + $0x70] sm:$0xff]
    %v671 = vld [vmem:[#allocation11 + $0x78] sm:$0xff]
    %v672 = vld [vmem:[#allocation11 + $0x80] sm:$0xff]
    %v673 = vld [vmem:[#allocation11 + $0x88] sm:$0xff]
    %v674 = vld [vmem:[#allocation11 + $0x90] sm:$0xff]
    %v675 = vld [vmem:[#allocation11 + $0x98] sm:$0xff]
    %v676 = vld [vmem:[#allocation11 + $0xa0] sm:$0xff]
    %v677 = vld [vmem:[#allocation11 + $0xa8] sm:$0xff]
    %v678 = vld [vmem:[#allocation11 + $0xb0] sm:$0xff]
    %v679 = vld [vmem:[#allocation11 + $0xb8] sm:$0xff]
    %v680 = vld [vmem:[#allocation11 + $0xc0] sm:$0xff]
    %v681 = vld [vmem:[#allocation11 + $0xc8] sm:$0xff]
    %v682 = vld [vmem:[#allocation11 + $0xd0] sm:$0xff]
    %v683 = vld [vmem:[#allocation11 + $0xd8] sm:$0xff]
    %v684 = vld [vmem:[#allocation11 + $0xe0] sm:$0xff]
    %v685 = vld [vmem:[#allocation11 + $0xe8] sm:$0xff]
    %v686 = vld [vmem:[#allocation11 + $0xf0] sm:$0xff]
    %v687 = vld [vmem:[#allocation11 + $0xf8] sm:$0xff]
    %v688 = vld [vmem:[%s10] sm:$0x1]
    %v690 = vlaneseq
    %v691 = vshrl.u32 %v690, 7
    %v692 = vsub.s32 0, %v691
    %v693 = vrot.slane %v688, %v692
    %695 = vmatprep.subr.mxu0 0.0
    %696 = vmatpush1.msra.mxu0 %v671
    %697 = vmatprep.subr.mxu0 0.0
    %698 = vmatpush1.msra.mxu0 %v670
    %699 = vmatprep.subr.mxu0 0.0
    %700 = vmatpush1.msra.mxu0 %v669
    %701 = vmatprep.subr.mxu0 0.0
    %702 = vmatpush1.msra.mxu0 %v668
    %703 = vmatprep.subr.mxu0 0.0
    %704 = vmatpush1.msra.mxu0 %v667
    %705 = vmatprep.subr.mxu0 0.0
    %706 = vmatpush1.msra.mxu0 %v666
    %707 = vmatprep.subr.mxu0 0.0
    %708 = vmatpush1.msra.mxu0 %v665
    %709 = vmatprep.subr.mxu0 0.0
    %710 = vmatpush1.msra.mxu0 %v664
    %711 = vmatprep.subr.mxu0 0.0
    %712 = vmatpush1.msra.mxu0 %v663
    %713 = vmatprep.subr.mxu0 0.0
    %714 = vmatpush1.msra.mxu0 %v662
    %715 = vmatprep.subr.mxu0 0.0
    %716 = vmatpush1.msra.mxu0 %v661
    %717 = vmatprep.subr.mxu0 0.0
    %718 = vmatpush1.msra.mxu0 %v660
    %719 = vmatprep.subr.mxu0 0.0
    %720 = vmatpush1.msra.mxu0 %v659
    %721 = vmatprep.subr.mxu0 0.0
    %722 = vmatpush1.msra.mxu0 %v658
    %723 = vmatprep.subr.mxu0 0.0
    %724 = vmatpush1.msra.mxu0 %v657
    %725 = vmatprep.subr.mxu0 0.0
    %726 = vmatpush1.msra.mxu0 %v656
    %727 = vmatprep.subr.mxu0 0.0
    %728 = vmatpush2.msra.mxu0 %v687
    %729 = vmatprep.subr.mxu0 0.0
    %730 = vmatpush2.msra.mxu0 %v686
    %731 = vmatprep.subr.mxu0 0.0
    %732 = vmatpush2.msra.mxu0 %v685
    %733 = vmatprep.subr.mxu0 0.0
    %734 = vmatpush2.msra.mxu0 %v684
    %735 = vmatprep.subr.mxu0 0.0
    %736 = vmatpush2.msra.mxu0 %v683
    %737 = vmatprep.subr.mxu0 0.0
    %738 = vmatpush2.msra.mxu0 %v682
    %739 = vmatprep.subr.mxu0 0.0
    %740 = vmatpush2.msra.mxu0 %v681
    %741 = vmatprep.subr.mxu0 0.0
    %742 = vmatpush2.msra.mxu0 %v680
    %743 = vmatprep.subr.mxu0 0.0
    %744 = vmatpush2.msra.mxu0 %v679
    %745 = vmatprep.subr.mxu0 0.0
    %746 = vmatpush2.msra.mxu0 %v678
    %747 = vmatprep.subr.mxu0 0.0
    %748 = vmatpush2.msra.mxu0 %v677
    %749 = vmatprep.subr.mxu0 0.0
    %750 = vmatpush2.msra.mxu0 %v676
    %751 = vmatprep.subr.mxu0 0.0
    %752 = vmatpush2.msra.mxu0 %v675
    %753 = vmatprep.subr.mxu0 0.0
    %754 = vmatpush2.msra.mxu0 %v674
    %755 = vmatprep.subr.mxu0 0.0
    %756 = vmatpush2.msra.mxu0 %v673
    %757 = vmatprep.subr.mxu0 0.0
    %758 = vmatpush2.msra.mxu0 %v672
    %759 = vmatprep.mubr.f32.mxu0 %v654
    %760 = vmatmul.mubr.f32.gmra.mxu0 %v652
    %v761 = vpop.f32.mrf.mxu0
    %v762 = vadd.f32 %v693, %v761
    %v763 = vpop.f32.mrf.mxu0
    %764 = vdwg.mxu0
    %765 = vst [vmem:[#allocation13] sm:$0xff] %v762
    // Predicated region
    $region70: #{tpu_custom_call.1} parent=1 // pred_check
      _
    $region71: #{tpu_custom_call.1} parent=1 // pred_check_branch
      %767 = sbr.rel (0) target = $region73
    $region72: #{tpu_custom_call.1} parent=1 // pred_region
      %s769 = ssub.s32 128, 128
      %770 = vsyncadd [#allocation4], %s769
      %s772 = sshll.u32 [#allocation13], 4
      %s773 = int_to_ptr.vmem [resolvable:$true] %s772
      %775 = dma.vmem_to_hbm [thread:$0]  %s773, 128, %s11, [#allocation4]
    $region73: #{tpu_custom_call.1} parent=1 // pred_fallthru
      _
    // Predicated region
    $region74: #{tpu_custom_call.1} parent=1 // pred_check
      _
    $region75: #{tpu_custom_call.1} parent=1 // pred_check_branch
      %777 = sbr.rel (0) target = $region77
    $region76: #{tpu_custom_call.1} parent=1 // pred_region
      %778 = dma.done [#allocation4], 128
    $region77: #{tpu_custom_call.1} parent=1 // pred_fallthru
      _
    %779 = vsyncpa [#allocation3], 1
    %780 = vsyncpa [#allocation6], 1
    %781 = vsyncpa [#allocation9], 1
    %782 = vsyncpa [#allocation12], 1
    %783 = vsyncpa [#allocation4], 1

</llo_original>
